<compile_context>
chip_gen: v6e
topology: v6e:2x2x1
jax: 0.10.0
libtpu: 0.0.40
codegen_flags: <defaults>
</compile_context>

<pallas_src>
import functools

import jax
import jax.numpy as jnp
from jax.experimental import pallas as pl
from jax.experimental.pallas import tpu as pltpu


# --------------------------------------------------------------------------- #
# Kernels
# --------------------------------------------------------------------------- #
def _projected_pool_full_kernel(x_ref, wpre_ref, bpre_ref, wpost_ref,
                                bpost_ref, o_ref):
    """One batch element per grid step; full spatial extent in one block.

    x_ref    : (1, Cin, M)    input slab (spatial flattened on lanes)
    wpre_ref : (Cmid, Cin)    pre-conv weight, BN scale folded into rows
    bpre_ref : (Cmid, 1)      folded BN bias
    wpost_ref: (Cout, Cmid)   post-conv weight, 1/M pool norm folded in
    bpost_ref: (Cout, 1)      post-conv bias
    o_ref    : (1, Cout, 1)   output block
    """
    x = x_ref[0]                                                # (Cin, M)
    # pre_conv (1x1x1) + folded BN bias + ReLU  -- channel matmul on the MXU
    h = jnp.dot(wpre_ref[...], x, preferred_element_type=jnp.float32)
    h = jnp.maximum(h + bpre_ref[...], 0.0)                     # (Cmid, M) f32
    # global average pool: spatial sum (1/M is folded into wpost)
    pooled = jnp.sum(h, axis=1, keepdims=True)                  # (Cmid, 1)
    # post_conv (1x1x1, bias) + ReLU
    y = jnp.dot(wpost_ref[...], pooled, preferred_element_type=jnp.float32)
    y = jnp.maximum(y + bpost_ref[...], 0.0)                    # (Cout, 1)
    o_ref[0] = y.astype(o_ref.dtype)


def _projected_pool_tiled_kernel(x_ref, wpre_ref, bpre_ref, wpost_ref,
                                 bpost_ref, o_ref, acc_ref,
                                 *, m_total, tile_m, need_mask):
    """(batch, spatial-tile) grid step for spatial extents too big for one block."""
    s = pl.program_id(1)

    @pl.when(s == 0)
    def _():
        acc_ref[...] = jnp.zeros_like(acc_ref)

    x = x_ref[0]                                                # (Cin, tile_m)
    h = jnp.dot(wpre_ref[...], x, preferred_element_type=jnp.float32)
    h = jnp.maximum(h + bpre_ref[...], 0.0)                     # (Cmid, tile_m)

    if need_mask:
        # Zero the out-of-range lanes of the (possibly partial) last tile.
        lane = jax.lax.broadcasted_iota(jnp.int32, h.shape, 1)
        h = jnp.where(s * tile_m + lane < m_total, h, 0.0)

    acc_ref[...] += jnp.sum(h, axis=1, keepdims=True)           # (Cmid, 1)

    @pl.when(s == pl.num_programs(1) - 1)
    def _():
        y = jnp.dot(wpost_ref[...], acc_ref[...],
                    preferred_element_type=jnp.float32)
        y = jnp.maximum(y + bpost_ref[...], 0.0)                # (Cout, 1)
        o_ref[0] = y.astype(o_ref.dtype)


# --------------------------------------------------------------------------- #
# Wrapper
# --------------------------------------------------------------------------- #
@functools.partial(jax.jit, static_argnames=("block_bytes_limit",))
def projected_pool(x_ncthw, w_pre, bn_pre, w_post, b_post,
                   *, block_bytes_limit=24 * 1024 * 1024):
    """ProjectedPool forward.

    x_ncthw: (N, Cin, T, H, W)        -- PyTorch Conv3d convention
    w_pre  : (Cmid, Cin, 1, 1, 1)     pre_conv weight (bias=False)
    bn_pre : (gamma, beta, mean, var) pre_norm BatchNorm3d running stats
    w_post : (Cout, Cmid, 1, 1, 1)    post_conv weight
    b_post : (Cout,)                  post_conv bias
    returns: (N, Cout, 1, 1, 1)
    """
    N, Cin, T, H, W = x_ncthw.shape
    Cmid = w_pre.shape[0]
    Cout = w_post.shape[0]
    M = T * H * W

    # Free reshape (merges contiguous trailing dims) -- NO transpose of x.
    x_l = x_ncthw.reshape(N, Cin, M)

    # Fold BN (eval mode) into the pre-conv weight rows / a bias column.
    gamma, beta, mean, var = bn_pre
    eps = 1e-5  # TODO(synk): thread the module's BatchNorm eps through if configurable
    scale = gamma / jnp.sqrt(var + eps)                         # (Cmid,)
    wpre_k = w_pre[:, :, 0, 0, 0] * scale[:, None]              # (Cmid, Cin)
    bpre_k = (beta - mean * scale).reshape(Cmid, 1)             # (Cmid, 1)

    # Fold the 1/M average-pool normalization into the post-conv weight.
    wpost_k = w_post[:, :, 0, 0, 0] * (1.0 / M)                 # (Cout, Cmid)
    bpost_k = b_post.reshape(Cout, 1)                           # (Cout, 1)

    x_bytes = x_l.dtype.itemsize
    out_bytes = x_l.dtype.itemsize
    weight_bytes = 4 * (Cmid * Cin + Cmid + Cout * Cmid + Cout)
    flops = 2 * N * M * Cin * Cmid + 2 * N * Cmid * Cout
    bytes_accessed = N * M * Cin * x_bytes + weight_bytes + N * Cout * out_bytes
    cost = pl.CostEstimate(flops=flops, transcendentals=0,
                           bytes_accessed=bytes_accessed)

    # Rough per-step VMEM footprint of the full-spatial path:
    # double-buffered x block + f32 (Cmid, M) intermediates + weights.
    full_block_bytes = 2 * Cin * M * x_bytes + 2 * Cmid * M * 4 + weight_bytes

    if full_block_bytes <= block_bytes_limit or M < 128:
        # ---- primary path: whole spatial extent per batch element ----------
        out = pl.pallas_call(
            _projected_pool_full_kernel,
            out_shape=jax.ShapeDtypeStruct((N, Cout, 1), x_ncthw.dtype),
            grid_spec=pltpu.PrefetchScalarGridSpec(
                num_scalar_prefetch=0,
                grid=(N,),
                in_specs=[
                    pl.BlockSpec((1, Cin, M), lambda n: (n, 0, 0)),
                    pl.BlockSpec((Cmid, Cin), lambda n: (0, 0)),
                    pl.BlockSpec((Cmid, 1), lambda n: (0, 0)),
                    pl.BlockSpec((Cout, Cmid), lambda n: (0, 0)),
                    pl.BlockSpec((Cout, 1), lambda n: (0, 0)),
                ],
                out_specs=pl.BlockSpec((1, Cout, 1), lambda n: (n, 0, 0)),
            ),
            compiler_params=pltpu.CompilerParams(
                dimension_semantics=("parallel",)),
            cost_estimate=cost,
        )(x_l, wpre_k, bpre_k, wpost_k, bpost_k)
    else:
        # ---- fallback: cdiv-tiled spatial axis with tail masking -----------
        per_col_bytes = 2 * Cin * x_bytes + 2 * Cmid * 4
        tile_m = (block_bytes_limit // per_col_bytes) // 128 * 128
        tile_m = max(128, min(tile_m, 4096, (M // 128) * 128))
        n_tiles = pl.cdiv(M, tile_m)
        need_mask = (M % tile_m) != 0

        kernel = functools.partial(_projected_pool_tiled_kernel,
                                   m_total=M, tile_m=tile_m,
                                   need_mask=need_mask)
        out = pl.pallas_call(
            kernel,
            out_shape=jax.ShapeDtypeStruct((N, Cout, 1), x_ncthw.dtype),
            grid_spec=pltpu.PrefetchScalarGridSpec(
                num_scalar_prefetch=0,
                grid=(N, n_tiles),
                in_specs=[
                    pl.BlockSpec((1, Cin, tile_m), lambda n, s: (n, 0, s)),
                    pl.BlockSpec((Cmid, Cin), lambda n, s: (0, 0)),
                    pl.BlockSpec((Cmid, 1), lambda n, s: (0, 0)),
                    pl.BlockSpec((Cout, Cmid), lambda n, s: (0, 0)),
                    pl.BlockSpec((Cout, 1), lambda n, s: (0, 0)),
                ],
                out_specs=pl.BlockSpec((1, Cout, 1), lambda n, s: (n, 0, 0)),
                scratch_shapes=[pltpu.VMEM((Cmid, 1), jnp.float32)],
            ),
            compiler_params=pltpu.CompilerParams(
                dimension_semantics=("parallel", "arbitrary")),
            cost_estimate=cost,
        )(x_l, wpre_k, bpre_k, wpost_k, bpost_k)

    return out.reshape(N, Cout, 1, 1, 1)


# ------------------------- pure-JAX reference (glue) ------------------------ #
def _reference(x, w_pre, bn_pre, w_post, b_post, eps=1e-5):
    g, b, m, v = (p.reshape(1, -1, 1, 1, 1) for p in bn_pre)
    y = jnp.einsum('ncthw,kc->nkthw', x, w_pre[:, :, 0, 0, 0],
                   precision=jax.lax.Precision.HIGHEST)
    y = (y - m) / jnp.sqrt(v + eps) * g + b                 # BatchNorm3d (eval)
    y = jnp.maximum(y, 0.0)                                 # pre_act ReLU
    y = jnp.mean(y, axis=(2, 3, 4), keepdims=True)          # global AvgPool3d
    y = jnp.einsum('ncthw,kc->nkthw', y, w_post[:, :, 0, 0, 0],
                   precision=jax.lax.Precision.HIGHEST)
    y = y + b_post.reshape(1, -1, 1, 1, 1)
    return jnp.maximum(y, 0.0)                              # post_act ReLU


if __name__ == "__main__":
    # Small shapes consistent with an X3D head ProjectedPool.
    N, Cin, Cmid, Cout = 2, 16, 32, 64

    key = jax.random.PRNGKey(0)
    ks = jax.random.split(key, 12)

    w_pre = jax.random.normal(ks[1], (Cmid, Cin, 1, 1, 1), jnp.float32) / jnp.sqrt(Cin)
    w_post = jax.random.normal(ks[2], (Cout, Cmid, 1, 1, 1), jnp.float32) / jnp.sqrt(Cmid)
    b_post = 0.1 * jax.random.normal(ks[3], (Cout,), jnp.float32)

    gamma = 1.0 + 0.1 * jax.random.normal(ks[4], (Cmid,), jnp.float32)
    beta = 0.1 * jax.random.normal(ks[5], (Cmid,), jnp.float32)
    mean = 0.1 * jax.random.normal(ks[6], (Cmid,), jnp.float32)
    var = jax.random.uniform(ks[7], (Cmid,), jnp.float32, minval=0.5, maxval=1.5)
    bn_pre = (gamma, beta, mean, var)

    # 1) Primary full-spatial-block path (the common X3D-head case).
    T, H, W = 4, 8, 8
    x = jax.random.normal(ks[0], (N, Cin, T, H, W), jnp.float32)
    out = jax.block_until_ready(projected_pool(x, w_pre, bn_pre, w_post, b_post))
    ref = jax.block_until_ready(_reference(x, w_pre, bn_pre, w_post, b_post))
    assert out.shape == (N, Cout, 1, 1, 1), out.shape
    # Kernel uses default (single-pass bf16) MXU precision per the perf review;
    # the reference uses HIGHEST, so allow a few e-3 of absolute slack.
    err = float(jnp.max(jnp.abs(out - ref)))
    assert err < 3e-2, f"full-block path mismatch vs reference: {err}"

    # 2) Tiled fallback path: force a tiny VMEM budget and a spatial extent that
    #    is not a multiple of 128 so the tail-masking code is exercised.
    T2, H2, W2 = 3, 7, 7
    x2 = jax.random.normal(ks[8], (N, Cin, T2, H2, W2), jnp.float32)
    out2 = jax.block_until_ready(
        projected_pool(x2, w_pre, bn_pre, w_post, b_post,
                       block_bytes_limit=4096))
    ref2 = jax.block_until_ready(_reference(x2, w_pre, bn_pre, w_post, b_post))
    assert out2.shape == (N, Cout, 1, 1, 1), out2.shape
    err2 = float(jnp.max(jnp.abs(out2 - ref2)))
    assert err2 < 3e-2, f"tiled path mismatch vs reference: {err2}"

    print("KERNEL_OK")
</pallas_src>

<mosaic_0001>
module attributes {stable_mosaic.version = 11 : i64} {
  func.func @_projected_pool_full_kernel(%arg0: i32, %arg1: memref<1x16x256xf32, #tpu.memory_space<vmem>>, %arg2: memref<32x16xf32, #tpu.memory_space<vmem>>, %arg3: memref<32x1xf32, #tpu.memory_space<vmem>>, %arg4: memref<64x32xf32, #tpu.memory_space<vmem>>, %arg5: memref<64x1xf32, #tpu.memory_space<vmem>>, %arg6: memref<1x64x1xf32, #tpu.memory_space<vmem>>) attributes {dimension_semantics = [#tpu.dimension_semantics<parallel>], iteration_bounds = array<i64: 2>, scalar_prefetch = 0 : i64, scratch_operands = 0 : i64, tpu.core_type = #tpu.core_type<tc>, window_params = [{transform_indices = @transform_0, window_bounds = array<i64: 1, 16, 256>}, {pipeline_mode = #tpu.pipeline_mode<synchronous>, transform_indices = @transform_1, window_bounds = array<i64: 32, 16>}, {pipeline_mode = #tpu.pipeline_mode<synchronous>, transform_indices = @transform_2, window_bounds = array<i64: 32, 1>}, {pipeline_mode = #tpu.pipeline_mode<synchronous>, transform_indices = @transform_3, window_bounds = array<i64: 64, 32>}, {pipeline_mode = #tpu.pipeline_mode<synchronous>, transform_indices = @transform_4, window_bounds = array<i64: 64, 1>}, {transform_indices = @transform_5, window_bounds = array<i64: 1, 64, 1>}]} {
    %c0 = arith.constant 0 : index
    %c0_0 = arith.constant 0 : index
    %c0_1 = arith.constant 0 : index
    %0 = vector.load %arg1[%c0, %c0_0, %c0_1] : memref<1x16x256xf32, #tpu.memory_space<vmem>>, vector<1x16x256xf32>
    %1 = vector.shape_cast %0 : vector<1x16x256xf32> to vector<16x256xf32>
    %c0_2 = arith.constant 0 : index
    %c0_3 = arith.constant 0 : index
    %2 = vector.load %arg2[%c0_2, %c0_3] : memref<32x16xf32, #tpu.memory_space<vmem>>, vector<32x16xf32>
    %cst = arith.constant dense<0.000000e+00> : vector<32x256xf32>
    %3 = tpu.matmul %2, %1, %cst {dimension_numbers = #tpu.dot_dimension_numbers<[1], [0], [0], [1], [0, 0, 1, 1], [], []>} : vector<32x16xf32>, vector<16x256xf32>, vector<32x256xf32> -> vector<32x256xf32>
    %c0_4 = arith.constant 0 : index
    %c0_5 = arith.constant 0 : index
    %4 = vector.load %arg3[%c0_4, %c0_5] : memref<32x1xf32, #tpu.memory_space<vmem>>, vector<32x1xf32>
    %5 = vector.broadcast %4 : vector<32x1xf32> to vector<32x256xf32>
    %6 = arith.addf %3, %5 : vector<32x256xf32>
    %cst_6 = arith.constant 0.000000e+00 : f32
    %7 = vector.broadcast %cst_6 : f32 to vector<32x256xf32>
    %8 = arith.maximumf %6, %7 : vector<32x256xf32>
    %cst_7 = arith.constant dense<0.000000e+00> : vector<32xf32>
    %9 = vector.multi_reduction <add>, %8, %cst_7 [1] : vector<32x256xf32> to vector<32xf32>
    %10 = vector.shape_cast %9 : vector<32xf32> to vector<32x1xf32>
    %c0_8 = arith.constant 0 : index
    %c0_9 = arith.constant 0 : index
    %11 = vector.load %arg4[%c0_8, %c0_9] : memref<64x32xf32, #tpu.memory_space<vmem>>, vector<64x32xf32>
    %cst_10 = arith.constant dense<0.000000e+00> : vector<64x1xf32>
    %12 = tpu.matmul %11, %10, %cst_10 {dimension_numbers = #tpu.dot_dimension_numbers<[1], [0], [0], [1], [0, 0, 1, 1], [], []>} : vector<64x32xf32>, vector<32x1xf32>, vector<64x1xf32> -> vector<64x1xf32>
    %c0_11 = arith.constant 0 : index
    %c0_12 = arith.constant 0 : index
    %13 = vector.load %arg5[%c0_11, %c0_12] : memref<64x1xf32, #tpu.memory_space<vmem>>, vector<64x1xf32>
    %14 = arith.addf %12, %13 : vector<64x1xf32>
    %cst_13 = arith.constant 0.000000e+00 : f32
    %15 = vector.broadcast %cst_13 : f32 to vector<64x1xf32>
    %16 = arith.maximumf %14, %15 : vector<64x1xf32>
    %c0_14 = arith.constant 0 : index
    %c0_15 = arith.constant 0 : index
    %c0_16 = arith.constant 0 : index
    %17 = vector.load %arg6[%c0_14, %c0_15, %c0_16] : memref<1x64x1xf32, #tpu.memory_space<vmem>>, vector<1x64x1xf32>
    %18 = vector.shape_cast %17 : vector<1x64x1xf32> to vector<64x1xf32>
    %19 = vector.shape_cast %16 : vector<64x1xf32> to vector<1x64x1xf32>
    tpu.vector_store %arg6[%c0_14, %c0_15, %c0_16], %19 {strides = array<i32>} : memref<1x64x1xf32, #tpu.memory_space<vmem>>, vector<1x64x1xf32>,
    return
  }
  func.func @transform_0(%arg0: i32) -> (i32, i32, i32) {
    %c0_i32 = arith.constant 0 : i32
    %c0_i32_0 = arith.constant 0 : i32
    %c0_i32_1 = arith.constant 0 : i32
    return %arg0, %c0_i32, %c0_i32_0 : i32, i32, i32
  }
  func.func @transform_1(%arg0: i32) -> (i32, i32) {
    %c0_i32 = arith.constant 0 : i32
    %c0_i32_0 = arith.constant 0 : i32
    %c0_i32_1 = arith.constant 0 : i32
    return %c0_i32, %c0_i32_0 : i32, i32
  }
  func.func @transform_2(%arg0: i32) -> (i32, i32) {
    %c0_i32 = arith.constant 0 : i32
    %c0_i32_0 = arith.constant 0 : i32
    %c0_i32_1 = arith.constant 0 : i32
    return %c0_i32, %c0_i32_0 : i32, i32
  }
  func.func @transform_3(%arg0: i32) -> (i32, i32) {
    %c0_i32 = arith.constant 0 : i32
    %c0_i32_0 = arith.constant 0 : i32
    %c0_i32_1 = arith.constant 0 : i32
    return %c0_i32, %c0_i32_0 : i32, i32
  }
  func.func @transform_4(%arg0: i32) -> (i32, i32) {
    %c0_i32 = arith.constant 0 : i32
    %c0_i32_0 = arith.constant 0 : i32
    %c0_i32_1 = arith.constant 0 : i32
    return %c0_i32, %c0_i32_0 : i32, i32
  }
  func.func @transform_5(%arg0: i32) -> (i32, i32, i32) {
    %c0_i32 = arith.constant 0 : i32
    %c0_i32_0 = arith.constant 0 : i32
    %c0_i32_1 = arith.constant 0 : i32
    return %arg0, %c0_i32, %c0_i32_0 : i32, i32, i32
  }
}

</mosaic_0001>

<llo_original>
// kernel: projected_pool.1
$region0: #{projected_pool.1}
  #allocation0 [shape = 'u32[]', space=smem, size = 0x4, offset = 0x4, fixed_abs, tag = 'smem constant byte address 0x4 - core index']
  #allocation1 [shape = 'u32[144,128]{1,0:T(1,128)}', space=vmem, size = 0x12000, scoped, tag = 'internal scratch']
  %s0 = inlined_call_operand.vmem [shape: f32[2,16,256], index: 0, kind: input, shape index: {}]
  %s1 = inlined_call_operand.vmem [shape: f32[32,16], index: 1, kind: input, shape index: {}]
  %s2 = inlined_call_operand.vmem [shape: f32[32,1], index: 2, kind: input, shape index: {}]
  %s3 = inlined_call_operand.vmem [shape: f32[64,32], index: 3, kind: input, shape index: {}]
  %s4 = inlined_call_operand.vmem [shape: f32[64,1], index: 4, kind: input, shape index: {}]
  %s5 = inlined_call_operand.vmem [shape: f32[2,64,1], index: 5, kind: output, shape index: {}]
  %s6 = sld [smem:[#allocation0]]
  $region53: #{projected_pool.1} parent=0
    _
  %s8 = ssub.s32 1, %s6
  %s9 = scalar_select 0, %s8, %s6
  loop: start=0, step=1, limit=4
  $region2: #{projected_pool.1} parent=0 // loop_pre_header
    _
  $region3: #{projected_pool.1} parent=0 // loop_header
    %s11 = sphi 0, %s15
    %p12 = scmp.ge.s32.totalorder %s11, 4
    %s21 = sphi 0, %s23
    %s24 = sphi 0, %s21
    %s25 = sphi 0, %s24
    %s41 = sphi 0, %s25
    %s45 = sphi 0, %s45
    %s47 = sphi 0, %s45
    %s48 = sphi 0, %s47
    %s62 = sphi 0, %s48
    %s66 = sphi 0, %s66
    %s68 = sphi 0, %s66
    %s69 = sphi 0, %s68
    %s83 = sphi 0, %s69
    %s87 = sphi 0, %s87
    %s89 = sphi 0, %s87
    %s90 = sphi 0, %s89
    %s104 = sphi 0, %s90
    %s108 = sphi 0, %s108
    %s110 = sphi 0, %s108
    %s111 = sphi 0, %s110
    %s125 = sphi 0, %s111
    %s131 = sphi 0, %s133
    %s134 = sphi 0, %s131
    %s135 = sphi 0, %s134
    %s151 = sphi 0, %s135
  $region4: #{projected_pool.1} parent=0 // loop_header_branch
    %14 = sbr.rel (%p12) target = $region8
  $region5: #{projected_pool.1} parent=0 // loop_body
    %s16 = ssub.s32 %s11, 1
    %s17 = ssub.s32 %s11, 2
    %s18 = sadd.s32 %s11, 1
    %s19 = ssub.s32 %s11, %s18
    %p20 = scmp.eq.s32.totalorder %s19, 0
    %s22 = sadd.s32 %s21, 1
    %s23 = scalar_select %p20, %s21, %s22
    %p26 = pneg %p20
    %p27 = scmp.eq.s32.totalorder %s11, 1
    %p28 = por %p26, %p27
    %p29 = scmp.ne.s32.totalorder %s21, %s24
    %p30 = scmp.eq.s32.totalorder %s11, 0
    %p31 = por %p29, %p30
    %p32 = scmp.ne.s32.totalorder %s21, %s24
    %p33 = scmp.eq.s32.totalorder %s16, 1
    %p34 = por %p32, %p33
    %p35 = scmp.ne.s32.totalorder %s24, %s25
    %p36 = scmp.eq.s32.totalorder %s16, 0
    %p37 = por %p35, %p36
    %p38 = scmp.ne.s32.totalorder %s24, %s25
    %p39 = scmp.eq.s32.totalorder %s17, 1
    %p40 = por %p38, %p39
    %p42 = scmp.ne.s32.totalorder %s25, %s41
    %p43 = scmp.eq.s32.totalorder %s17, 0
    %p44 = por %p42, %p43
    %s46 = sadd.s32 %s45, 1
    %p49 = scmp.eq.s32.totalorder %s11, 1
    %p50 = scmp.ne.s32.totalorder %s45, %s47
    %p51 = scmp.eq.s32.totalorder %s11, 0
    %p52 = por %p50, %p51
    %p53 = scmp.ne.s32.totalorder %s45, %s47
    %p54 = scmp.eq.s32.totalorder %s16, 1
    %p55 = por %p53, %p54
    %p56 = scmp.ne.s32.totalorder %s47, %s48
    %p57 = scmp.eq.s32.totalorder %s16, 0
    %p58 = por %p56, %p57
    %p59 = scmp.ne.s32.totalorder %s47, %s48
    %p60 = scmp.eq.s32.totalorder %s17, 1
    %p61 = por %p59, %p60
    %p63 = scmp.ne.s32.totalorder %s48, %s62
    %p64 = scmp.eq.s32.totalorder %s17, 0
    %p65 = por %p63, %p64
    %s67 = sadd.s32 %s66, 1
    %p70 = scmp.eq.s32.totalorder %s11, 1
    %p71 = scmp.ne.s32.totalorder %s66, %s68
    %p72 = scmp.eq.s32.totalorder %s11, 0
    %p73 = por %p71, %p72
    %p74 = scmp.ne.s32.totalorder %s66, %s68
    %p75 = scmp.eq.s32.totalorder %s16, 1
    %p76 = por %p74, %p75
    %p77 = scmp.ne.s32.totalorder %s68, %s69
    %p78 = scmp.eq.s32.totalorder %s16, 0
    %p79 = por %p77, %p78
    %p80 = scmp.ne.s32.totalorder %s68, %s69
    %p81 = scmp.eq.s32.totalorder %s17, 1
    %p82 = por %p80, %p81
    %p84 = scmp.ne.s32.totalorder %s69, %s83
    %p85 = scmp.eq.s32.totalorder %s17, 0
    %p86 = por %p84, %p85
    %s88 = sadd.s32 %s87, 1
    %p91 = scmp.eq.s32.totalorder %s11, 1
    %p92 = scmp.ne.s32.totalorder %s87, %s89
    %p93 = scmp.eq.s32.totalorder %s11, 0
    %p94 = por %p92, %p93
    %p95 = scmp.ne.s32.totalorder %s87, %s89
    %p96 = scmp.eq.s32.totalorder %s16, 1
    %p97 = por %p95, %p96
    %p98 = scmp.ne.s32.totalorder %s89, %s90
    %p99 = scmp.eq.s32.totalorder %s16, 0
    %p100 = por %p98, %p99
    %p101 = scmp.ne.s32.totalorder %s89, %s90
    %p102 = scmp.eq.s32.totalorder %s17, 1
    %p103 = por %p101, %p102
    %p105 = scmp.ne.s32.totalorder %s90, %s104
    %p106 = scmp.eq.s32.totalorder %s17, 0
    %p107 = por %p105, %p106
    %s109 = sadd.s32 %s108, 1
    %p112 = scmp.eq.s32.totalorder %s11, 1
    %p113 = scmp.ne.s32.totalorder %s108, %s110
    %p114 = scmp.eq.s32.totalorder %s11, 0
    %p115 = por %p113, %p114
    %p116 = scmp.ne.s32.totalorder %s108, %s110
    %p117 = scmp.eq.s32.totalorder %s16, 1
    %p118 = por %p116, %p117
    %p119 = scmp.ne.s32.totalorder %s110, %s111
    %p120 = scmp.eq.s32.totalorder %s16, 0
    %p121 = por %p119, %p120
    %p122 = scmp.ne.s32.totalorder %s110, %s111
    %p123 = scmp.eq.s32.totalorder %s17, 1
    %p124 = por %p122, %p123
    %p126 = scmp.ne.s32.totalorder %s111, %s125
    %p127 = scmp.eq.s32.totalorder %s17, 0
    %p128 = por %p126, %p127
    %s129 = ssub.s32 %s11, %s18
    %p130 = scmp.eq.s32.totalorder %s129, 0
    %s132 = sadd.s32 %s131, 1
    %s133 = scalar_select %p130, %s131, %s132
    %p136 = pneg %p130
    %p137 = scmp.eq.s32.totalorder %s11, 1
    %p138 = por %p136, %p137
    %p139 = scmp.ne.s32.totalorder %s131, %s134
    %p140 = scmp.eq.s32.totalorder %s11, 0
    %p141 = por %p139, %p140
    %p142 = scmp.ne.s32.totalorder %s131, %s134
    %p143 = scmp.eq.s32.totalorder %s16, 1
    %p144 = por %p142, %p143
    %p145 = scmp.ne.s32.totalorder %s134, %s135
    %p146 = scmp.eq.s32.totalorder %s16, 0
    %p147 = por %p145, %p146
    %p148 = scmp.ne.s32.totalorder %s134, %s135
    %p149 = scmp.eq.s32.totalorder %s17, 1
    %p150 = por %p148, %p149
    %p152 = scmp.ne.s32.totalorder %s135, %s151
    %p153 = scmp.eq.s32.totalorder %s17, 0
    %p154 = por %p152, %p153
    %p155 = scmp.le.s32.totalorder 1, %s11
    %p156 = scmp.lt.s32.totalorder %s11, 3
    %p157 = pnand %p155, %p156
    %p158 = pneg %p157
    // Predicated region
    $region9: #{projected_pool.1} parent=5 // pred_check
      _
    $region10: #{projected_pool.1} parent=5 // pred_check_branch
      %160 = sbr.rel (%p157) target = $region12
    $region11: #{projected_pool.1} parent=5 // pred_region
      %s161 = ssub.s32 %s11, 1
      // Predicated region
      $region13: #{projected_pool.1} parent=11 // pred_check
        %p162 = pneg %p58
      $region14: #{projected_pool.1} parent=11 // pred_check_branch
        %164 = sbr.rel (%p162) target = $region16
      $region15: #{projected_pool.1} parent=11 // pred_region
        _
      $region16: #{projected_pool.1} parent=11 // pred_fallthru
        _
      // Predicated region
      $region17: #{projected_pool.1} parent=11 // pred_check
        %p165 = pneg %p79
      $region18: #{projected_pool.1} parent=11 // pred_check_branch
        %167 = sbr.rel (%p165) target = $region20
      $region19: #{projected_pool.1} parent=11 // pred_region
        _
      $region20: #{projected_pool.1} parent=11 // pred_fallthru
        _
      // Predicated region
      $region21: #{projected_pool.1} parent=11 // pred_check
        %p168 = pneg %p100
      $region22: #{projected_pool.1} parent=11 // pred_check_branch
        %170 = sbr.rel (%p168) target = $region24
      $region23: #{projected_pool.1} parent=11 // pred_region
        _
      $region24: #{projected_pool.1} parent=11 // pred_fallthru
        _
      // Predicated region
      $region25: #{projected_pool.1} parent=11 // pred_check
        %p171 = pneg %p121
      $region26: #{projected_pool.1} parent=11 // pred_check_branch
        %173 = sbr.rel (%p171) target = $region28
      $region27: #{projected_pool.1} parent=11 // pred_region
        _
      $region28: #{projected_pool.1} parent=11 // pred_fallthru
        _
    $region12: #{projected_pool.1} parent=5 // pred_fallthru
      _
    %p174 = scmp.lt.s32.totalorder %s11, 2
    // Predicated region
    $region29: #{projected_pool.1} parent=5 // pred_check
      %p175 = pneg %p174
    $region30: #{projected_pool.1} parent=5 // pred_check_branch
      %177 = sbr.rel (%p175) target = $region32
    $region31: #{projected_pool.1} parent=5 // pred_region
      // Predicated region
      $region33: #{projected_pool.1} parent=31 // pred_check
        %p178 = pneg %p31
      $region34: #{projected_pool.1} parent=31 // pred_check_branch
        %180 = sbr.rel (%p178) target = $region36
      $region35: #{projected_pool.1} parent=31 // pred_region
        %p181 = scmp.lt.s32.totalorder %s11, 1
        %s182 = scalar_select %p181, %s11, 1
        %s183 = smul.addr %s182, 4
        %s184 = smul.addr %s183, 8
        %s185 = scalar_lea.vmem %s0, %s184
      $region36: #{projected_pool.1} parent=31 // pred_fallthru
        _
    $region32: #{projected_pool.1} parent=5 // pred_fallthru
      _
    %p186 = scmp.le.s32.totalorder 1, %s11
    %p187 = scmp.lt.s32.totalorder %s11, 3
    %p188 = pnand %p186, %p187
    %p189 = pneg %p188
    // Predicated region
    $region37: #{projected_pool.1} parent=5 // pred_check
      _
    $region38: #{projected_pool.1} parent=5 // pred_check_branch
      %191 = sbr.rel (%p188) target = $region40
    $region39: #{projected_pool.1} parent=5 // pred_region
      %s192 = ssub.s32 %s11, 1
      %p193 = scmp.lt.s32.totalorder %s16, 1
      %s194 = scalar_select %p193, %s16, 1
      %s195 = smul.addr %s194, 4
      %s196 = smul.addr %s195, 8
      %s197 = scalar_lea.vmem %s0, %s196
      %p198 = pneg %p37
      %p199 = pneg %p34
      %p200 = pneg %p58
      %p201 = pneg %p55
      %p202 = pneg %p79
      %p203 = pneg %p76
      %p204 = pneg %p100
      %p205 = pneg %p97
      %p206 = pneg %p121
      %p207 = pneg %p118
      %p208 = pneg %p147
      %p209 = pneg %p144
      %p210 = scmp.lt.s32.totalorder %s16, 1
      %s211 = scalar_select %p210, %s16, 1
      %s212 = smul.addr %s211, 8
      %s213 = smul.addr %s212, 8
      %s214 = scalar_lea.vmem %s5, %s213
      %p215 = scmp.lt.s32.totalorder %s16, 1
      %s216 = scalar_select %p215, %s16, 1
      %s217 = smul.addr %s216, 4
      %s218 = smul.addr %s217, 8
      %s219 = scalar_lea.vmem %s0, %s218
      %p220 = scmp.lt.s32.totalorder %s16, 1
      %s221 = scalar_select %p220, %s16, 1
      %s222 = smul.addr %s221, 8
      %s223 = smul.addr %s222, 8
      %s224 = scalar_lea.vmem %s5, %s223
      %v225 = vld [vmem:[%s219] sm:$0xff]
      %v226 = vld [vmem:[%s219 + $0x8] sm:$0xff]
      %v227 = vld [vmem:[%s219 + $0x10] sm:$0xff]
      %v228 = vld [vmem:[%s219 + $0x18] sm:$0xff]
      %v229 = vld [vmem:[%s1] sm:$0xff]
      %v230 = vld [vmem:[%s1 + $0x8] sm:$0xff]
      %v231 = vld [vmem:[%s1 + $0x10] sm:$0xff]
      %v232 = vld [vmem:[%s1 + $0x18] sm:$0xff]
      %v233 = vld [vmem:[%s2] sm:$0xff]
      %v234 = vld [vmem:[%s2 + $0x8] sm:$0xff]
      %v235 = vld [vmem:[%s2 + $0x10] sm:$0xff]
      %v236 = vld [vmem:[%s2 + $0x18] sm:$0xff]
      %238 = vset.pattern.permute.xlu0 0
      %239 = vperm.xlu0 %238, %v233
      %v240 = vpop.permute.xlu0 %239
      %243 = vset.pattern.permute.xlu0 0
      %244 = vperm.xlu0 %243, %v234
      %v245 = vpop.permute.xlu0 %244
      %248 = vset.pattern.permute.xlu0 0
      %249 = vperm.xlu0 %248, %v235
      %v250 = vpop.permute.xlu0 %249
      %253 = vset.pattern.permute.xlu0 0
      %254 = vperm.xlu0 %253, %v236
      %v255 = vpop.permute.xlu0 %254
      %vm257 = vcmask 130048
      %v259 = vsel %vm257, %v229, 0
      %v262 = vsel %vm257, %v230, 0
      %v265 = vsel %vm257, %v231, 0
      %v268 = vsel %vm257, %v232, 0
      %270 = vmatprep.subr.mxu0 0.0
      %271 = vmatpush1.msra.mxu0 0.0
      %272 = vmatprep.subr.mxu0 0.0
      %273 = vmatpush1.msra.mxu0 0.0
      %274 = vmatprep.subr.mxu0 0.0
      %275 = vmatpush1.msra.mxu0 0.0
      %276 = vmatprep.subr.mxu0 0.0
      %277 = vmatpush1.msra.mxu0 0.0
      %278 = vmatprep.subr.mxu0 0.0
      %279 = vmatpush1.msra.mxu0 0.0
      %280 = vmatprep.subr.mxu0 0.0
      %281 = vmatpush1.msra.mxu0 0.0
      %282 = vmatprep.subr.mxu0 0.0
      %283 = vmatpush1.msra.mxu0 0.0
      %284 = vmatprep.subr.mxu0 0.0
      %285 = vmatpush1.msra.mxu0 0.0
      %286 = vmatprep.subr.mxu0 0.0
      %287 = vmatpush1.msra.mxu0 0.0
      %288 = vmatprep.subr.mxu0 0.0
      %289 = vmatpush1.msra.mxu0 0.0
      %290 = vmatprep.subr.mxu0 0.0
      %291 = vmatpush1.msra.mxu0 0.0
      %292 = vmatprep.subr.mxu0 0.0
      %293 = vmatpush1.msra.mxu0 0.0
      %294 = vmatprep.subr.mxu0 0.0
      %295 = vmatpush1.msra.mxu0 0.0
      %296 = vmatprep.subr.mxu0 0.0
      %297 = vmatpush1.msra.mxu0 0.0
      %298 = vmatprep.subr.mxu0 %v228
      %299 = vmatpush1.msra.mxu0 %v227
      %300 = vmatprep.subr.mxu0 %v226
      %301 = vmatpush1.msra.mxu0 %v225
      %302 = vmatprep.subr.mxu0 0.0
      %303 = vmatpush2.msra.mxu0 0.0
      %304 = vmatprep.subr.mxu0 0.0
      %305 = vmatpush2.msra.mxu0 0.0
      %306 = vmatprep.subr.mxu0 0.0
      %307 = vmatpush2.msra.mxu0 0.0
      %308 = vmatprep.subr.mxu0 0.0
      %309 = vmatpush2.msra.mxu0 0.0
      %310 = vmatprep.subr.mxu0 0.0
      %311 = vmatpush2.msra.mxu0 0.0
      %312 = vmatprep.subr.mxu0 0.0
      %313 = vmatpush2.msra.mxu0 0.0
      %314 = vmatprep.subr.mxu0 0.0
      %315 = vmatpush2.msra.mxu0 0.0
      %316 = vmatprep.subr.mxu0 0.0
      %317 = vmatpush2.msra.mxu0 0.0
      %318 = vmatprep.subr.mxu0 0.0
      %319 = vmatpush2.msra.mxu0 0.0
      %320 = vmatprep.subr.mxu0 0.0
      %321 = vmatpush2.msra.mxu0 0.0
      %322 = vmatprep.subr.mxu0 0.0
      %323 = vmatpush2.msra.mxu0 0.0
      %324 = vmatprep.subr.mxu0 0.0
      %325 = vmatpush2.msra.mxu0 0.0
      %326 = vmatprep.subr.mxu0 0.0
      %327 = vmatpush2.msra.mxu0 0.0
      %328 = vmatprep.subr.mxu0 0.0
      %329 = vmatpush2.msra.mxu0 0.0
      %330 = vmatprep.subr.mxu0 0.0
      %331 = vmatpush2.msra.mxu0 0.0
      %332 = vmatprep.subr.mxu0 0.0
      %333 = vmatpush2.msra.mxu0 0.0
      %334 = vmatprep.mubr.f32.mxu0 0.0
      %335 = vmatmul.mubr.f32.gmra.mxu0 %v259
      %v336 = vpop.f32.mrf.mxu0
      %v337 = vadd.f32 %v240, %v336
      %v338 = vpop.f32.mrf.mxu0
      %v339 = vadd.f32 %v240, %v338
      %340 = vmatprep.mubr.f32.mxu0 0.0
      %341 = vmatmul.mubr.f32.gmra.mxu0 %v262
      %v342 = vpop.f32.mrf.mxu0
      %v343 = vadd.f32 %v245, %v342
      %v344 = vpop.f32.mrf.mxu0
      %v345 = vadd.f32 %v245, %v344
      %346 = vmatprep.mubr.f32.mxu0 0.0
      %347 = vmatmul.mubr.f32.gmra.mxu0 %v265
      %v348 = vpop.f32.mrf.mxu0
      %v349 = vadd.f32 %v250, %v348
      %v350 = vpop.f32.mrf.mxu0
      %v351 = vadd.f32 %v250, %v350
      %352 = vmatprep.mubr.f32.mxu0 0.0
      %353 = vmatmul.mubr.f32.gmra.mxu0 %v268
      %v354 = vpop.f32.mrf.mxu0
      %v355 = vadd.f32 %v255, %v354
      %v356 = vpop.f32.mrf.mxu0
      %v357 = vadd.f32 %v255, %v356
      %358 = vdwg.mxu0
      %v359 = vmax.f32 %v337, 0.0
      %v360 = vmax.f32 %v339, 0.0
      %v361 = vmax.f32 %v343, 0.0
      %v362 = vmax.f32 %v345, 0.0
      %v363 = vmax.f32 %v349, 0.0
      %v364 = vmax.f32 %v351, 0.0
      %v365 = vmax.f32 %v355, 0.0
      %v366 = vmax.f32 %v357, 0.0
      %v367 = vadd.f32 %v359, %v360
      %368 = vadd.xlane.f32.xlu0 %v367
      %v369 = vpop.xlane.xlu0 %368
      %v370 = vadd.f32 %v361, %v362
      %371 = vadd.xlane.f32.xlu0 %v370
      %v372 = vpop.xlane.xlu0 %371
      %v373 = vadd.f32 %v363, %v364
      %374 = vadd.xlane.f32.xlu0 %v373
      %v375 = vpop.xlane.xlu0 %374
      %v376 = vadd.f32 %v365, %v366
      %377 = vadd.xlane.f32.xlu0 %v376
      %v378 = vpop.xlane.xlu0 %377
      %v379 = vld [vmem:[%s3] sm:$0xff]
      %v380 = vld [vmem:[%s3 + $0x8] sm:$0xff]
      %v381 = vld [vmem:[%s3 + $0x10] sm:$0xff]
      %v382 = vld [vmem:[%s3 + $0x18] sm:$0xff]
      %v383 = vld [vmem:[%s3 + $0x20] sm:$0xff]
      %v384 = vld [vmem:[%s3 + $0x28] sm:$0xff]
      %v385 = vld [vmem:[%s3 + $0x30] sm:$0xff]
      %v386 = vld [vmem:[%s3 + $0x38] sm:$0xff]
      %v387 = vld [vmem:[%s4] sm:$0xff]
      %v388 = vld [vmem:[%s4 + $0x8] sm:$0xff]
      %v389 = vld [vmem:[%s4 + $0x10] sm:$0xff]
      %v390 = vld [vmem:[%s4 + $0x18] sm:$0xff]
      %v391 = vld [vmem:[%s4 + $0x20] sm:$0xff]
      %v392 = vld [vmem:[%s4 + $0x28] sm:$0xff]
      %v393 = vld [vmem:[%s4 + $0x30] sm:$0xff]
      %v394 = vld [vmem:[%s4 + $0x38] sm:$0xff]
      %vm395 = vcmask 261120
      %v397 = vsel %vm395, %v379, 0
      %v400 = vsel %vm395, %v380, 0
      %v403 = vsel %vm395, %v381, 0
      %v406 = vsel %vm395, %v382, 0
      %v409 = vsel %vm395, %v383, 0
      %v412 = vsel %vm395, %v384, 0
      %v415 = vsel %vm395, %v385, 0
      %v418 = vsel %vm395, %v386, 0
      %420 = vmatprep.subr.mxu0 0.0
      %421 = vmatpush1.msra.mxu0 0.0
      %422 = vmatprep.subr.mxu0 0.0
      %423 = vmatpush1.msra.mxu0 0.0
      %424 = vmatprep.subr.mxu0 0.0
      %425 = vmatpush1.msra.mxu0 0.0
      %426 = vmatprep.subr.mxu0 0.0
      %427 = vmatpush1.msra.mxu0 0.0
      %428 = vmatprep.subr.mxu0 0.0
      %429 = vmatpush1.msra.mxu0 0.0
      %430 = vmatprep.subr.mxu0 0.0
      %431 = vmatpush1.msra.mxu0 0.0
      %432 = vmatprep.subr.mxu0 0.0
      %433 = vmatpush1.msra.mxu0 0.0
      %434 = vmatprep.subr.mxu0 0.0
      %435 = vmatpush1.msra.mxu0 0.0
      %436 = vmatprep.subr.mxu0 0.0
      %437 = vmatpush1.msra.mxu0 0.0
      %438 = vmatprep.subr.mxu0 0.0
      %439 = vmatpush1.msra.mxu0 0.0
      %440 = vmatprep.subr.mxu0 0.0
      %441 = vmatpush1.msra.mxu0 0.0
      %442 = vmatprep.subr.mxu0 0.0
      %443 = vmatpush1.msra.mxu0 0.0
      %444 = vmatprep.subr.mxu0 0.0
      %445 = vmatpush1.msra.mxu0 %v378
      %446 = vmatprep.subr.mxu0 0.0
      %447 = vmatpush1.msra.mxu0 %v375
      %448 = vmatprep.subr.mxu0 0.0
      %449 = vmatpush1.msra.mxu0 %v372
      %450 = vmatprep.subr.mxu0 0.0
      %451 = vmatpush1.msra.mxu0 %v369
      %452 = vmatprep.subr.mxu0 0.0
      %453 = vmatpush2.msra.mxu0 0.0
      %454 = vmatprep.subr.mxu0 0.0
      %455 = vmatpush2.msra.mxu0 0.0
      %456 = vmatprep.subr.mxu0 0.0
      %457 = vmatpush2.msra.mxu0 0.0
      %458 = vmatprep.subr.mxu0 0.0
      %459 = vmatpush2.msra.mxu0 0.0
      %460 = vmatprep.subr.mxu0 0.0
      %461 = vmatpush2.msra.mxu0 0.0
      %462 = vmatprep.subr.mxu0 0.0
      %463 = vmatpush2.msra.mxu0 0.0
      %464 = vmatprep.subr.mxu0 0.0
      %465 = vmatpush2.msra.mxu0 0.0
      %466 = vmatprep.subr.mxu0 0.0
      %467 = vmatpush2.msra.mxu0 0.0
      %468 = vmatprep.subr.mxu0 0.0
      %469 = vmatpush2.msra.mxu0 0.0
      %470 = vmatprep.subr.mxu0 0.0
      %471 = vmatpush2.msra.mxu0 0.0
      %472 = vmatprep.subr.mxu0 0.0
      %473 = vmatpush2.msra.mxu0 0.0
      %474 = vmatprep.subr.mxu0 0.0
      %475 = vmatpush2.msra.mxu0 0.0
      %476 = vmatprep.subr.mxu0 0.0
      %477 = vmatpush2.msra.mxu0 0.0
      %478 = vmatprep.subr.mxu0 0.0
      %479 = vmatpush2.msra.mxu0 0.0
      %480 = vmatprep.subr.mxu0 0.0
      %481 = vmatpush2.msra.mxu0 0.0
      %482 = vmatprep.subr.mxu0 0.0
      %483 = vmatpush2.msra.mxu0 0.0
      %484 = vmatprep.mubr.f32.mxu0 0.0
      %485 = vmatmul.mubr.f32.gmra.mxu0 %v397
      %v486 = vpop.f32.mrf.mxu0
      %v487 = vadd.f32 %v387, %v486
      %v488 = vpop.f32.mrf.mxu0
      %489 = vmatprep.mubr.f32.mxu0 0.0
      %490 = vmatmul.mubr.f32.gmra.mxu0 %v400
      %v491 = vpop.f32.mrf.mxu0
      %v492 = vadd.f32 %v388, %v491
      %v493 = vpop.f32.mrf.mxu0
      %494 = vmatprep.mubr.f32.mxu0 0.0
      %495 = vmatmul.mubr.f32.gmra.mxu0 %v403
      %v496 = vpop.f32.mrf.mxu0
      %v497 = vadd.f32 %v389, %v496
      %v498 = vpop.f32.mrf.mxu0
      %499 = vmatprep.mubr.f32.mxu0 0.0
      %500 = vmatmul.mubr.f32.gmra.mxu0 %v406
      %v501 = vpop.f32.mrf.mxu0
      %v502 = vadd.f32 %v390, %v501
      %v503 = vpop.f32.mrf.mxu0
      %504 = vmatprep.mubr.f32.mxu0 0.0
      %505 = vmatmul.mubr.f32.gmra.mxu0 %v409
      %v506 = vpop.f32.mrf.mxu0
      %v507 = vadd.f32 %v391, %v506
      %v508 = vpop.f32.mrf.mxu0
      %509 = vmatprep.mubr.f32.mxu0 0.0
      %510 = vmatmul.mubr.f32.gmra.mxu0 %v412
      %v511 = vpop.f32.mrf.mxu0
      %v512 = vadd.f32 %v392, %v511
      %v513 = vpop.f32.mrf.mxu0
      %514 = vmatprep.mubr.f32.mxu0 0.0
      %515 = vmatmul.mubr.f32.gmra.mxu0 %v415
      %v516 = vpop.f32.mrf.mxu0
      %v517 = vadd.f32 %v393, %v516
      %v518 = vpop.f32.mrf.mxu0
      %519 = vmatprep.mubr.f32.mxu0 0.0
      %520 = vmatmul.mubr.f32.gmra.mxu0 %v418
      %v521 = vpop.f32.mrf.mxu0
      %v522 = vadd.f32 %v394, %v521
      %v523 = vpop.f32.mrf.mxu0
      %524 = vdwg.mxu0
      %v525 = vmax.f32 %v487, 0.0
      %v526 = vmax.f32 %v492, 0.0
      %v527 = vmax.f32 %v497, 0.0
      %v528 = vmax.f32 %v502, 0.0
      %v529 = vmax.f32 %v507, 0.0
      %v530 = vmax.f32 %v512, 0.0
      %v531 = vmax.f32 %v517, 0.0
      %v532 = vmax.f32 %v522, 0.0
      %vm533 = vcmask 7168
      %534 = vst.msk [vmem:[%s224] sm:$0xff] %vm533, %v525
      %535 = vst.msk [vmem:[%s224 + $0x8] sm:$0xff] %vm533, %v526
      %536 = vst.msk [vmem:[%s224 + $0x10] sm:$0xff] %vm533, %v527
      %537 = vst.msk [vmem:[%s224 + $0x18] sm:$0xff] %vm533, %v528
      %538 = vst.msk [vmem:[%s224 + $0x20] sm:$0xff] %vm533, %v529
      %539 = vst.msk [vmem:[%s224 + $0x28] sm:$0xff] %vm533, %v530
      %540 = vst.msk [vmem:[%s224 + $0x30] sm:$0xff] %vm533, %v531
      %541 = vst.msk [vmem:[%s224 + $0x38] sm:$0xff] %vm533, %v532
      %p542 = scmp.lt.s32.totalorder %s16, 1
      %s543 = scalar_select %p542, %s16, 1
      %s544 = smul.addr %s543, 8
      %s545 = smul.addr %s544, 8
      %s546 = scalar_lea.vmem %s5, %s545
      // Predicated region
      $region41: #{projected_pool.1} parent=39 // pred_check
        %p547 = pneg %p144
      $region42: #{projected_pool.1} parent=39 // pred_check_branch
        %549 = sbr.rel (%p547) target = $region44
      $region43: #{projected_pool.1} parent=39 // pred_region
        _
      $region44: #{projected_pool.1} parent=39 // pred_fallthru
        _
    $region40: #{projected_pool.1} parent=5 // pred_fallthru
      _
    %p550 = scmp.le.s32.totalorder 2, %s11
    // Predicated region
    $region45: #{projected_pool.1} parent=5 // pred_check
      %p551 = pneg %p550
    $region46: #{projected_pool.1} parent=5 // pred_check_branch
      %553 = sbr.rel (%p551) target = $region48
    $region47: #{projected_pool.1} parent=5 // pred_region
      %s554 = ssub.s32 %s11, 2
      // Predicated region
      $region49: #{projected_pool.1} parent=47 // pred_check
        %p555 = pneg %p150
      $region50: #{projected_pool.1} parent=47 // pred_check_branch
        %557 = sbr.rel (%p555) target = $region52
      $region51: #{projected_pool.1} parent=47 // pred_region
        %p558 = scmp.lt.s32.totalorder %s17, 1
        %s559 = scalar_select %p558, %s17, 1
        %s560 = smul.addr %s559, 8
        %s561 = smul.addr %s560, 8
        %s562 = scalar_lea.vmem %s5, %s561
      $region52: #{projected_pool.1} parent=47 // pred_fallthru
        _
    $region48: #{projected_pool.1} parent=5 // pred_fallthru
      _
  $region6: #{projected_pool.1} parent=0 // loop_footer
    %s15 = sadd.s32 1, %s11
  $region7: #{projected_pool.1} parent=0 // loop_footer_branch
    %10 = sbr.rel target = $region3
  $region8: #{projected_pool.1} parent=0 // loop_exit
    _

</llo_original>
